<compile_context>
chip_gen: v7x
topology: tpu7x:2x2x1
jax: 0.10.0
libtpu: 0.0.40
codegen_flags: <defaults>
</compile_context>

<pallas_src>
import jax
import jax.numpy as jnp
from jax.experimental import pallas as pl
from jax.experimental.pallas import tpu as pltpu

# ---------------- Config (small synthetic sizes consistent with the module) --
BATCH = 8                 # B
SEQ_LEN = 16              # L
EMBED_DIM = 32            # E
KERNEL_NUM = 16           # K  (output channels per Conv1d)
KERNEL_SIZE_LIST = (3, 4, 5)
CLASS_NUM = 8             # C

_VMEM = pl.BlockSpec(memory_space=pltpu.MemorySpace.VMEM)


# ------------------------------------------------------------------
# Fused kernel: one packed conv matmul + shift-add + masked max-pool + Linear
# ------------------------------------------------------------------
def make_cnn_kernel(kernel_sizes, B, L, K):
    n = len(kernel_sizes)
    max_k = max(kernel_sizes)
    G = n * K                                   # feature width (= 48 here)
    l_outs = [L - k + 1 for k in kernel_sizes]  # valid output length per conv

    def kernel(x_ref, w_all_ref, b_all_ref, lin_w_ref, lin_b_ref, out_ref):
        x = x_ref[...]                                        # (B*L, E)

        # One lane-dense MXU matmul computes every tap of every conv at once.
        y = jnp.dot(x, w_all_ref[...],
                    preferred_element_type=jnp.float32)       # (B*L, max_k*G)

        # Shift-add the tap groups along the time axis.  Row r = b*L + t needs
        # y[r+dk, tap-dk group].  For every *valid* t (t < L_out_k) r+dk stays
        # inside the same batch block, so a circular row roll on the flattened
        # array is exact there; invalid tail rows are masked below.
        acc = y[:, 0:G]                                       # tap 0 (no shift)
        for dk in range(1, max_k):
            acc = acc + jnp.roll(y[:, dk * G:(dk + 1) * G], -dk, axis=0)

        # Mask rows t >= L_out_k (per conv's 16-channel column block), then
        # max-pool over time.
        acc3 = acc.reshape(B, L, G)
        t_idx = jax.lax.broadcasted_iota(jnp.int32, (B, L, G), 1)
        c_idx = jax.lax.broadcasted_iota(jnp.int32, (B, L, G), 2)
        limit = jnp.full((B, L, G), l_outs[-1], jnp.int32)
        for ci in range(n - 2, -1, -1):
            limit = jnp.where(c_idx < (ci + 1) * K, l_outs[ci], limit)
        acc3 = jnp.where(t_idx < limit, acc3, -jnp.inf)
        pooled = jnp.max(acc3, axis=1)                        # (B, G)

        # Bias after pooling + ReLU (max_t ReLU(a_t + b) == ReLU(max_t a_t + b)
        # because ReLU is monotone and b is time-invariant).
        feat = jnp.maximum(pooled + b_all_ref[...], 0.0)      # (B, G)

        # TODO(synk): nn.Dropout is identity at inference; not modeled.
        out_ref[...] = (jnp.dot(feat, lin_w_ref[...],
                                preferred_element_type=jnp.float32)
                        + lin_b_ref[...])                     # (B, C)

    return kernel


def cnn_forward(x, packed):
    w_all, b_all, lin_wt, lin_b = packed
    B, L, E = x.shape
    C = lin_b.shape[-1]
    x_flat = x.reshape(B * L, E)                              # host-side, free

    return pl.pallas_call(
        make_cnn_kernel(KERNEL_SIZE_LIST, B, L, KERNEL_NUM),
        out_shape=jax.ShapeDtypeStruct((B, C), jnp.float32),
        in_specs=[_VMEM] * 5,
        out_specs=_VMEM,
    )(x_flat, w_all, b_all, lin_wt, lin_b)


# ------------------------------------------------------------------
# Host-side packing of PyTorch-layout parameters into kernel operands
# ------------------------------------------------------------------
def pack_params(params):
    ks = KERNEL_SIZE_LIST
    n, K, E = len(ks), KERNEL_NUM, EMBED_DIM
    max_k, G = max(ks), len(ks) * KERNEL_NUM

    # W_all: tap-major groups of n*K columns; missing taps stay zero.
    w_all = jnp.zeros((E, max_k * G), jnp.float32)
    for dk in range(max_k):
        for ci, k in enumerate(ks):
            if dk < k:
                w_tap = params[f"conv_w{k}"][:, :, dk].T       # (E, K)
                col0 = dk * G + ci * K
                w_all = w_all.at[:, col0:col0 + K].set(w_tap)

    b_all = jnp.concatenate([params[f"conv_b{k}"] for k in ks]).reshape(1, G)
    lin_wt = params["lin_w"].T                                 # (G, C)
    lin_b = params["lin_b"].reshape(1, -1)                     # (1, C)
    return w_all, b_all, lin_wt, lin_b


# ------------------------------------------------------------------
# Pure-JAX reference (PyTorch-layout params) for a correctness check
# ------------------------------------------------------------------
def cnn_reference(x, params):
    B, L, E = x.shape
    feats = []
    for k in KERNEL_SIZE_LIST:
        w = params[f"conv_w{k}"]                  # (K, E, k)  PyTorch Conv1d
        b = params[f"conv_b{k}"]                  # (K,)
        L_out = L - k + 1
        acc = jnp.zeros((B, L_out, KERNEL_NUM), jnp.float32)
        for dk in range(k):
            acc = acc + jnp.einsum("ble,oe->blo", x[:, dk:dk + L_out, :], w[:, :, dk])
        c = jnp.maximum(acc + b[None, None, :], 0.0)
        feats.append(jnp.max(c, axis=1))
    feat = jnp.concatenate(feats, axis=1)
    return feat @ params["lin_w"].T + params["lin_b"][None, :]


# ------------------------------------------------------------------
# Deterministic parameter init (PyTorch layouts per CNN.__init__)
# ------------------------------------------------------------------
def init_params(key):
    ks = KERNEL_SIZE_LIST
    keys = jax.random.split(key, 2 * len(ks) + 2)

    def u(k, shape, s=0.1):
        return jax.random.uniform(k, shape, jnp.float32, -s, s)

    params = {}
    for i, k in enumerate(ks):
        params[f"conv_w{k}"] = u(keys[2 * i], (KERNEL_NUM, EMBED_DIM, k))   # (K, E, k)
        params[f"conv_b{k}"] = u(keys[2 * i + 1], (KERNEL_NUM,))
    params["lin_w"] = u(keys[-2], (CLASS_NUM, KERNEL_NUM * len(ks)))        # (C, n*K)
    params["lin_b"] = u(keys[-1], (CLASS_NUM,))
    return params


if __name__ == "__main__":
    key = jax.random.PRNGKey(0)
    pkey, xkey = jax.random.split(key)
    params = init_params(pkey)
    packed = pack_params(params)

    x = jax.random.normal(xkey, (BATCH, SEQ_LEN, EMBED_DIM), jnp.float32)

    out = jax.block_until_ready(cnn_forward(x, packed))

    assert out.shape == (BATCH, CLASS_NUM), out.shape
    assert bool(jnp.all(jnp.isfinite(out)))

    ref = cnn_reference(x, params)
    assert bool(jnp.allclose(out, ref, atol=1e-4, rtol=1e-4)), \
        float(jnp.max(jnp.abs(out - ref)))

    print("KERNEL_OK")
</pallas_src>

<mosaic_0001>
module attributes {stable_mosaic.version = 11 : i64} {
  func.func @kernel(%arg0: memref<128x32xf32, #tpu.memory_space<vmem>>, %arg1: memref<32x240xf32, #tpu.memory_space<vmem>>, %arg2: memref<1x48xf32, #tpu.memory_space<vmem>>, %arg3: memref<48x8xf32, #tpu.memory_space<vmem>>, %arg4: memref<1x8xf32, #tpu.memory_space<vmem>>, %arg5: memref<8x8xf32, #tpu.memory_space<vmem>>) attributes {dimension_semantics = [], scalar_prefetch = 0 : i64, scratch_operands = 0 : i64, tpu.core_type = #tpu.core_type<tc>} {
    %c0 = arith.constant 0 : index
    %c0_0 = arith.constant 0 : index
    %0 = vector.load %arg0[%c0, %c0_0] : memref<128x32xf32, #tpu.memory_space<vmem>>, vector<128x32xf32>
    %c0_1 = arith.constant 0 : index
    %c0_2 = arith.constant 0 : index
    %1 = vector.load %arg1[%c0_1, %c0_2] : memref<32x240xf32, #tpu.memory_space<vmem>>, vector<32x240xf32>
    %cst = arith.constant dense<0.000000e+00> : vector<128x240xf32>
    %2 = tpu.matmul %0, %1, %cst {dimension_numbers = #tpu.dot_dimension_numbers<[1], [0], [0], [1], [0, 0, 1, 1], [], []>} : vector<128x32xf32>, vector<32x240xf32>, vector<128x240xf32> -> vector<128x240xf32>
    %3 = vector.extract_strided_slice %2 {offsets = [0, 0], sizes = [128, 48], strides = [1, 1]} : vector<128x240xf32> to vector<128x48xf32>
    %4 = vector.extract_strided_slice %2 {offsets = [0, 48], sizes = [128, 48], strides = [1, 1]} : vector<128x240xf32> to vector<128x48xf32>
    %5 = vector.extract_strided_slice %4 {offsets = [1, 0], sizes = [127, 48], strides = [1, 1]} : vector<128x48xf32> to vector<127x48xf32>
    %6 = vector.extract_strided_slice %4 {offsets = [0, 0], sizes = [1, 48], strides = [1, 1]} : vector<128x48xf32> to vector<1x48xf32>
    %7 = tpu.concatenate %5, %6 in 0 : vector<127x48xf32>, vector<1x48xf32> -> vector<128x48xf32>
    %8 = arith.addf %3, %7 : vector<128x48xf32>
    %9 = vector.extract_strided_slice %2 {offsets = [0, 96], sizes = [128, 48], strides = [1, 1]} : vector<128x240xf32> to vector<128x48xf32>
    %10 = vector.extract_strided_slice %9 {offsets = [2, 0], sizes = [126, 48], strides = [1, 1]} : vector<128x48xf32> to vector<126x48xf32>
    %11 = vector.extract_strided_slice %9 {offsets = [0, 0], sizes = [2, 48], strides = [1, 1]} : vector<128x48xf32> to vector<2x48xf32>
    %12 = tpu.concatenate %10, %11 in 0 : vector<126x48xf32>, vector<2x48xf32> -> vector<128x48xf32>
    %13 = arith.addf %8, %12 : vector<128x48xf32>
    %14 = vector.extract_strided_slice %2 {offsets = [0, 144], sizes = [128, 48], strides = [1, 1]} : vector<128x240xf32> to vector<128x48xf32>
    %15 = vector.extract_strided_slice %14 {offsets = [3, 0], sizes = [125, 48], strides = [1, 1]} : vector<128x48xf32> to vector<125x48xf32>
    %16 = vector.extract_strided_slice %14 {offsets = [0, 0], sizes = [3, 48], strides = [1, 1]} : vector<128x48xf32> to vector<3x48xf32>
    %17 = tpu.concatenate %15, %16 in 0 : vector<125x48xf32>, vector<3x48xf32> -> vector<128x48xf32>
    %18 = arith.addf %13, %17 : vector<128x48xf32>
    %19 = vector.extract_strided_slice %2 {offsets = [0, 192], sizes = [128, 48], strides = [1, 1]} : vector<128x240xf32> to vector<128x48xf32>
    %20 = vector.extract_strided_slice %19 {offsets = [4, 0], sizes = [124, 48], strides = [1, 1]} : vector<128x48xf32> to vector<124x48xf32>
    %21 = vector.extract_strided_slice %19 {offsets = [0, 0], sizes = [4, 48], strides = [1, 1]} : vector<128x48xf32> to vector<4x48xf32>
    %22 = tpu.concatenate %20, %21 in 0 : vector<124x48xf32>, vector<4x48xf32> -> vector<128x48xf32>
    %23 = arith.addf %18, %22 : vector<128x48xf32>
    %24 = vector.shape_cast %23 : vector<128x48xf32> to vector<8x16x48xf32>
    %25 = tpu.iota {dimensions = array<i32: 1>} : vector<8x16x48xi32>
    %26 = tpu.iota {dimensions = array<i32: 2>} : vector<8x16x48xi32>
    %c12_i32 = arith.constant 12 : i32
    %27 = vector.broadcast %c12_i32 : i32 to vector<8x16x48xi32>
    %c32_i32 = arith.constant 32 : i32
    %28 = vector.broadcast %c32_i32 : i32 to vector<8x16x48xi32>
    %29 = arith.cmpi slt, %26, %28 : vector<8x16x48xi32>
    %c13_i32 = arith.constant 13 : i32
    %30 = vector.broadcast %c13_i32 : i32 to vector<8x16x48xi32>
    %31 = arith.select %29, %30, %27 : vector<8x16x48xi1>, vector<8x16x48xi32>
    %c16_i32 = arith.constant 16 : i32
    %32 = vector.broadcast %c16_i32 : i32 to vector<8x16x48xi32>
    %33 = arith.cmpi slt, %26, %32 : vector<8x16x48xi32>
    %c14_i32 = arith.constant 14 : i32
    %34 = vector.broadcast %c14_i32 : i32 to vector<8x16x48xi32>
    %35 = arith.select %33, %34, %31 : vector<8x16x48xi1>, vector<8x16x48xi32>
    %36 = arith.cmpi slt, %25, %35 : vector<8x16x48xi32>
    %cst_3 = arith.constant 0xFF800000 : f32
    %37 = vector.broadcast %cst_3 : f32 to vector<8x16x48xf32>
    %38 = arith.select %36, %24, %37 : vector<8x16x48xi1>, vector<8x16x48xf32>
    %cst_4 = arith.constant dense<0xFF800000> : vector<8x48xf32>
    %39 = vector.multi_reduction <maximumf>, %38, %cst_4 [1] : vector<8x16x48xf32> to vector<8x48xf32>
    %c0_5 = arith.constant 0 : index
    %c0_6 = arith.constant 0 : index
    %40 = vector.load %arg2[%c0_5, %c0_6] : memref<1x48xf32, #tpu.memory_space<vmem>>, vector<1x48xf32>
    %41 = vector.broadcast %40 : vector<1x48xf32> to vector<8x48xf32>
    %42 = arith.addf %39, %41 : vector<8x48xf32>
    %cst_7 = arith.constant 0.000000e+00 : f32
    %43 = vector.broadcast %cst_7 : f32 to vector<8x48xf32>
    %44 = arith.maximumf %42, %43 : vector<8x48xf32>
    %c0_8 = arith.constant 0 : index
    %c0_9 = arith.constant 0 : index
    %45 = vector.load %arg3[%c0_8, %c0_9] : memref<48x8xf32, #tpu.memory_space<vmem>>, vector<48x8xf32>
    %cst_10 = arith.constant dense<0.000000e+00> : vector<8x8xf32>
    %46 = tpu.matmul %44, %45, %cst_10 {dimension_numbers = #tpu.dot_dimension_numbers<[1], [0], [0], [1], [0, 0, 1, 1], [], []>} : vector<8x48xf32>, vector<48x8xf32>, vector<8x8xf32> -> vector<8x8xf32>
    %c0_11 = arith.constant 0 : index
    %c0_12 = arith.constant 0 : index
    %47 = vector.load %arg4[%c0_11, %c0_12] : memref<1x8xf32, #tpu.memory_space<vmem>>, vector<1x8xf32>
    %48 = vector.broadcast %47 : vector<1x8xf32> to vector<8x8xf32>
    %49 = arith.addf %46, %48 : vector<8x8xf32>
    %c0_13 = arith.constant 0 : index
    %c0_14 = arith.constant 0 : index
    %50 = vector.load %arg5[%c0_13, %c0_14] : memref<8x8xf32, #tpu.memory_space<vmem>>, vector<8x8xf32>
    tpu.vector_store %arg5[%c0_13, %c0_14], %49 {strides = array<i32>} : memref<8x8xf32, #tpu.memory_space<vmem>>, vector<8x8xf32>,
    return
  }
}

</mosaic_0001>

<llo_original>
// kernel: tpu_custom_call.1
$region0: #{tpu_custom_call.1}
  #allocation0 [shape = 'u32[]', space=smem, size = 0x4, offset = 0x4, fixed_abs, tag = 'smem constant byte address 0x4 - core index']
  #allocation1 [shape = 'u32[144,128]{1,0:T(1,128)}', space=vmem, size = 0x12000, scoped, tag = 'internal scratch']
  %s0 = inlined_call_operand.vmem [shape: f32[128,32], index: 0, kind: input, shape index: {}]
  %s1 = inlined_call_operand.vmem [shape: f32[32,240], index: 1, kind: input, shape index: {}]
  %s2 = inlined_call_operand.vmem [shape: f32[1,48], index: 2, kind: input, shape index: {}]
  %s3 = inlined_call_operand.vmem [shape: f32[48,8], index: 3, kind: input, shape index: {}]
  %s4 = inlined_call_operand.vmem [shape: f32[1,8], index: 4, kind: input, shape index: {}]
  %s5 = inlined_call_operand.hbm [shape: f32[8,8], index: 5, kind: output, shape index: {}]
  %s6 = sld [smem:[#allocation0]]
  $region30: #{tpu_custom_call.1} parent=0
    _
  %s8 = ssub.s32 1, %s6
  %s9 = scalar_select 0, %s8, %s6
  $region1: #{tpu_custom_call.1} parent=0
    #allocation2 [shape = 'u8[4096]{0}', space=vmem, size = 0x1000, scoped, tag = 'output window, operand 0, single buffered']
    #allocation3 [shape = 's32[1]{0}', space=sflag, size = 0x4, scoped, tag = 'scoped memory for tpu_custom_call.1']
    %10 = vsyncpa [#allocation3], 0
    // Predicated region
    $region2: #{tpu_custom_call.1} parent=1 // pred_check
      _
    $region3: #{tpu_custom_call.1} parent=1 // pred_check_branch
      %12 = sbr.rel (0) target = $region5
    $region4: #{tpu_custom_call.1} parent=1 // pred_region
      _
    $region5: #{tpu_custom_call.1} parent=1 // pred_fallthru
      _
    // Predicated region
    $region6: #{tpu_custom_call.1} parent=1 // pred_check
      _
    $region7: #{tpu_custom_call.1} parent=1 // pred_check_branch
      %14 = sbr.rel (0) target = $region9
    $region8: #{tpu_custom_call.1} parent=1 // pred_region
      _
    $region9: #{tpu_custom_call.1} parent=1 // pred_fallthru
      _
    // Predicated region
    $region10: #{tpu_custom_call.1} parent=1 // pred_check
      _
    $region11: #{tpu_custom_call.1} parent=1 // pred_check_branch
      %16 = sbr.rel (0) target = $region13
    $region12: #{tpu_custom_call.1} parent=1 // pred_region
      _
    $region13: #{tpu_custom_call.1} parent=1 // pred_fallthru
      _
    // Predicated region
    $region14: #{tpu_custom_call.1} parent=1 // pred_check
      _
    $region15: #{tpu_custom_call.1} parent=1 // pred_check_branch
      %18 = sbr.rel (0) target = $region17
    $region16: #{tpu_custom_call.1} parent=1 // pred_region
      _
    $region17: #{tpu_custom_call.1} parent=1 // pred_fallthru
      _
    // Predicated region
    $region18: #{tpu_custom_call.1} parent=1 // pred_check
      _
    $region19: #{tpu_custom_call.1} parent=1 // pred_check_branch
      %20 = sbr.rel (0) target = $region21
    $region20: #{tpu_custom_call.1} parent=1 // pred_region
      _
    $region21: #{tpu_custom_call.1} parent=1 // pred_fallthru
      _
    %v21 = vld [vmem:[%s0] sm:$0xff]
    %v22 = vld [vmem:[%s0 + $0x8] sm:$0xff]
    %v23 = vld [vmem:[%s0 + $0x10] sm:$0xff]
    %v24 = vld [vmem:[%s0 + $0x18] sm:$0xff]
    %v25 = vld [vmem:[%s0 + $0x20] sm:$0xff]
    %v26 = vld [vmem:[%s0 + $0x28] sm:$0xff]
    %v27 = vld [vmem:[%s0 + $0x30] sm:$0xff]
    %v28 = vld [vmem:[%s0 + $0x38] sm:$0xff]
    %v29 = vld [vmem:[%s0 + $0x40] sm:$0xff]
    %v30 = vld [vmem:[%s0 + $0x48] sm:$0xff]
    %v31 = vld [vmem:[%s0 + $0x50] sm:$0xff]
    %v32 = vld [vmem:[%s0 + $0x58] sm:$0xff]
    %v33 = vld [vmem:[%s0 + $0x60] sm:$0xff]
    %v34 = vld [vmem:[%s0 + $0x68] sm:$0xff]
    %v35 = vld [vmem:[%s0 + $0x70] sm:$0xff]
    %v36 = vld [vmem:[%s0 + $0x78] sm:$0xff]
    %v37 = vld [vmem:[%s1] sm:$0xff]
    %v38 = vld [vmem:[%s1 + $0x8] sm:$0xff]
    %v39 = vld [vmem:[%s1 + $0x10] sm:$0xff]
    %v40 = vld [vmem:[%s1 + $0x18] sm:$0xff]
    %v41 = vld [vmem:[%s1 + $0x20] sm:$0xff]
    %v42 = vld [vmem:[%s1 + $0x28] sm:$0xff]
    %v43 = vld [vmem:[%s1 + $0x30] sm:$0xff]
    %v44 = vld [vmem:[%s1 + $0x38] sm:$0xff]
    %vm45 = vcmask 261120
    %v47 = vsel %vm45, %v21, 0
    %v50 = vsel %vm45, %v22, 0
    %v53 = vsel %vm45, %v23, 0
    %v56 = vsel %vm45, %v24, 0
    %v59 = vsel %vm45, %v25, 0
    %v62 = vsel %vm45, %v26, 0
    %v65 = vsel %vm45, %v27, 0
    %v68 = vsel %vm45, %v28, 0
    %v71 = vsel %vm45, %v29, 0
    %v74 = vsel %vm45, %v30, 0
    %v77 = vsel %vm45, %v31, 0
    %v80 = vsel %vm45, %v32, 0
    %v83 = vsel %vm45, %v33, 0
    %v86 = vsel %vm45, %v34, 0
    %v89 = vsel %vm45, %v35, 0
    %v92 = vsel %vm45, %v36, 0
    %94 = vmatprep.subr.mxu0 %v38
    %95 = vmatpush1.msra.mxu0 %v37
    %96 = vmatprep.subr.mxu0 %v40
    %97 = vmatpush1.msra.mxu0 %v39
    %98 = vmatprep.subr.mxu0 %v42
    %99 = vmatpush1.msra.mxu0 %v41
    %100 = vmatprep.subr.mxu0 %v44
    %101 = vmatpush1.msra.mxu0 %v43
    %102 = vmatprep.subr.mxu0 0.0
    %103 = vmatpush1.msra.mxu0 0.0
    %104 = vmatprep.subr.mxu0 0.0
    %105 = vmatpush1.msra.mxu0 0.0
    %106 = vmatprep.subr.mxu0 0.0
    %107 = vmatpush1.msra.mxu0 0.0
    %108 = vmatprep.subr.mxu0 0.0
    %109 = vmatpush1.msra.mxu0 0.0
    %110 = vmatprep.subr.mxu0 0.0
    %111 = vmatpush1.msra.mxu0 0.0
    %112 = vmatprep.subr.mxu0 0.0
    %113 = vmatpush1.msra.mxu0 0.0
    %114 = vmatprep.subr.mxu0 0.0
    %115 = vmatpush1.msra.mxu0 0.0
    %116 = vmatprep.subr.mxu0 0.0
    %117 = vmatpush1.msra.mxu0 0.0
    %118 = vmatprep.subr.mxu0 0.0
    %119 = vmatpush1.msra.mxu0 0.0
    %120 = vmatprep.subr.mxu0 0.0
    %121 = vmatpush1.msra.mxu0 0.0
    %122 = vmatprep.subr.mxu0 0.0
    %123 = vmatpush1.msra.mxu0 0.0
    %124 = vmatprep.subr.mxu0 0.0
    %125 = vmatpush1.msra.mxu0 0.0
    %126 = vmatprep.subr.mxu0 0.0
    %127 = vmatpush1.msra.mxu0 0.0
    %128 = vmatprep.subr.mxu0 0.0
    %129 = vmatpush1.msra.mxu0 0.0
    %130 = vmatprep.subr.mxu0 0.0
    %131 = vmatpush1.msra.mxu0 0.0
    %132 = vmatprep.subr.mxu0 0.0
    %133 = vmatpush1.msra.mxu0 0.0
    %134 = vmatprep.subr.mxu0 0.0
    %135 = vmatpush1.msra.mxu0 0.0
    %136 = vmatprep.subr.mxu0 0.0
    %137 = vmatpush1.msra.mxu0 0.0
    %138 = vmatprep.subr.mxu0 0.0
    %139 = vmatpush1.msra.mxu0 0.0
    %140 = vmatprep.subr.mxu0 0.0
    %141 = vmatpush1.msra.mxu0 0.0
    %142 = vmatprep.subr.mxu0 0.0
    %143 = vmatpush1.msra.mxu0 0.0
    %144 = vmatprep.subr.mxu0 0.0
    %145 = vmatpush1.msra.mxu0 0.0
    %146 = vmatprep.subr.mxu0 0.0
    %147 = vmatpush1.msra.mxu0 0.0
    %148 = vmatprep.subr.mxu0 0.0
    %149 = vmatpush1.msra.mxu0 0.0
    %150 = vmatprep.subr.mxu0 0.0
    %151 = vmatpush1.msra.mxu0 0.0
    %152 = vmatprep.subr.mxu0 0.0
    %153 = vmatpush1.msra.mxu0 0.0
    %154 = vmatprep.subr.mxu0 0.0
    %155 = vmatpush1.msra.mxu0 0.0
    %156 = vmatprep.subr.mxu0 0.0
    %157 = vmatpush1.msra.mxu0 0.0
    %158 = vmatprep.mubr.f32.mxu0 0.0
    %159 = vmatmul.mubr.f32.gmra.mrb[0].mxu0 %v47
    %v160 = vpop.f32.mrb[0].mxu0
    %v161 = vadd.f32 0.0, %v160
    %v162 = vpop.f32.mrb[0].mxu0
    %v163 = vadd.f32 0.0, %v162
    %164 = vmatprep.mubr.f32.mxu0 0.0
    %165 = vmatmul.mubr.f32.gmra.mrb[0].mxu0 %v50
    %v166 = vpop.f32.mrb[0].mxu0
    %v167 = vadd.f32 0.0, %v166
    %v168 = vpop.f32.mrb[0].mxu0
    %v169 = vadd.f32 0.0, %v168
    %170 = vmatprep.mubr.f32.mxu0 0.0
    %171 = vmatmul.mubr.f32.gmra.mrb[0].mxu0 %v53
    %v172 = vpop.f32.mrb[0].mxu0
    %v173 = vadd.f32 0.0, %v172
    %v174 = vpop.f32.mrb[0].mxu0
    %v175 = vadd.f32 0.0, %v174
    %176 = vmatprep.mubr.f32.mxu0 0.0
    %177 = vmatmul.mubr.f32.gmra.mrb[0].mxu0 %v56
    %v178 = vpop.f32.mrb[0].mxu0
    %v179 = vadd.f32 0.0, %v178
    %v180 = vpop.f32.mrb[0].mxu0
    %v181 = vadd.f32 0.0, %v180
    %182 = vmatprep.mubr.f32.mxu0 0.0
    %183 = vmatmul.mubr.f32.gmra.mrb[0].mxu0 %v59
    %v184 = vpop.f32.mrb[0].mxu0
    %v185 = vadd.f32 0.0, %v184
    %v186 = vpop.f32.mrb[0].mxu0
    %v187 = vadd.f32 0.0, %v186
    %188 = vmatprep.mubr.f32.mxu0 0.0
    %189 = vmatmul.mubr.f32.gmra.mrb[0].mxu0 %v62
    %v190 = vpop.f32.mrb[0].mxu0
    %v191 = vadd.f32 0.0, %v190
    %v192 = vpop.f32.mrb[0].mxu0
    %v193 = vadd.f32 0.0, %v192
    %194 = vmatprep.mubr.f32.mxu0 0.0
    %195 = vmatmul.mubr.f32.gmra.mrb[0].mxu0 %v65
    %v196 = vpop.f32.mrb[0].mxu0
    %v197 = vadd.f32 0.0, %v196
    %v198 = vpop.f32.mrb[0].mxu0
    %v199 = vadd.f32 0.0, %v198
    %200 = vmatprep.mubr.f32.mxu0 0.0
    %201 = vmatmul.mubr.f32.gmra.mrb[0].mxu0 %v68
    %v202 = vpop.f32.mrb[0].mxu0
    %v203 = vadd.f32 0.0, %v202
    %v204 = vpop.f32.mrb[0].mxu0
    %v205 = vadd.f32 0.0, %v204
    %206 = vmatprep.mubr.f32.mxu0 0.0
    %207 = vmatmul.mubr.f32.gmra.mrb[0].mxu0 %v71
    %v208 = vpop.f32.mrb[0].mxu0
    %v209 = vadd.f32 0.0, %v208
    %v210 = vpop.f32.mrb[0].mxu0
    %v211 = vadd.f32 0.0, %v210
    %212 = vmatprep.mubr.f32.mxu0 0.0
    %213 = vmatmul.mubr.f32.gmra.mrb[0].mxu0 %v74
    %v214 = vpop.f32.mrb[0].mxu0
    %v215 = vadd.f32 0.0, %v214
    %v216 = vpop.f32.mrb[0].mxu0
    %v217 = vadd.f32 0.0, %v216
    %218 = vmatprep.mubr.f32.mxu0 0.0
    %219 = vmatmul.mubr.f32.gmra.mrb[0].mxu0 %v77
    %v220 = vpop.f32.mrb[0].mxu0
    %v221 = vadd.f32 0.0, %v220
    %v222 = vpop.f32.mrb[0].mxu0
    %v223 = vadd.f32 0.0, %v222
    %224 = vmatprep.mubr.f32.mxu0 0.0
    %225 = vmatmul.mubr.f32.gmra.mrb[0].mxu0 %v80
    %v226 = vpop.f32.mrb[0].mxu0
    %v227 = vadd.f32 0.0, %v226
    %v228 = vpop.f32.mrb[0].mxu0
    %v229 = vadd.f32 0.0, %v228
    %230 = vmatprep.mubr.f32.mxu0 0.0
    %231 = vmatmul.mubr.f32.gmra.mrb[0].mxu0 %v83
    %v232 = vpop.f32.mrb[0].mxu0
    %v233 = vadd.f32 0.0, %v232
    %v234 = vpop.f32.mrb[0].mxu0
    %v235 = vadd.f32 0.0, %v234
    %236 = vmatprep.mubr.f32.mxu0 0.0
    %237 = vmatmul.mubr.f32.gmra.mrb[0].mxu0 %v86
    %v238 = vpop.f32.mrb[0].mxu0
    %v239 = vadd.f32 0.0, %v238
    %v240 = vpop.f32.mrb[0].mxu0
    %v241 = vadd.f32 0.0, %v240
    %242 = vmatprep.mubr.f32.mxu0 0.0
    %243 = vmatmul.mubr.f32.gmra.mrb[0].mxu0 %v89
    %v244 = vpop.f32.mrb[0].mxu0
    %v245 = vadd.f32 0.0, %v244
    %v246 = vpop.f32.mrb[0].mxu0
    %v247 = vadd.f32 0.0, %v246
    %248 = vmatprep.mubr.f32.mxu0 0.0
    %249 = vmatmul.mubr.f32.gmra.mrb[0].mxu0 %v92
    %v250 = vpop.f32.mrb[0].mxu0
    %v251 = vadd.f32 0.0, %v250
    %v252 = vpop.f32.mrb[0].mxu0
    %v253 = vadd.f32 0.0, %v252
    %254 = vdwg.mxu0
    %vm271 = vcmask 1046528
    %v272 = vrot.slane %v161, 1
    %v273 = vrot.slane %v167, 1
    %v274 = vsel %vm271, %v272, %v273
    %v275 = vrot.slane %v173, 1
    %v276 = vsel %vm271, %v273, %v275
    %v277 = vrot.slane %v179, 1
    %v278 = vsel %vm271, %v275, %v277
    %v279 = vrot.slane %v185, 1
    %v280 = vsel %vm271, %v277, %v279
    %v281 = vrot.slane %v191, 1
    %v282 = vsel %vm271, %v279, %v281
    %v283 = vrot.slane %v197, 1
    %v284 = vsel %vm271, %v281, %v283
    %v285 = vrot.slane %v203, 1
    %v286 = vsel %vm271, %v283, %v285
    %v287 = vrot.slane %v209, 1
    %v288 = vsel %vm271, %v285, %v287
    %v289 = vrot.slane %v215, 1
    %v290 = vsel %vm271, %v287, %v289
    %v291 = vrot.slane %v221, 1
    %v292 = vsel %vm271, %v289, %v291
    %v293 = vrot.slane %v227, 1
    %v294 = vsel %vm271, %v291, %v293
    %v295 = vrot.slane %v233, 1
    %v296 = vsel %vm271, %v293, %v295
    %v297 = vrot.slane %v239, 1
    %v298 = vsel %vm271, %v295, %v297
    %v299 = vrot.slane %v245, 1
    %v300 = vsel %vm271, %v297, %v299
    %v301 = vrot.slane %v251, 1
    %v302 = vsel %vm271, %v299, %v301
    %v305 = vsel %vm271, %v301, %v272
    %307 = vrot.lane.b32.xlu0 %v274, 80
    %v308 = vpop.permute.xlu0 %307
    %309 = vrot.lane.b32.xlu0 %v276, 80
    %v310 = vpop.permute.xlu0 %309
    %311 = vrot.lane.b32.xlu0 %v278, 80
    %v312 = vpop.permute.xlu0 %311
    %313 = vrot.lane.b32.xlu0 %v280, 80
    %v314 = vpop.permute.xlu0 %313
    %315 = vrot.lane.b32.xlu0 %v282, 80
    %v316 = vpop.permute.xlu0 %315
    %317 = vrot.lane.b32.xlu0 %v284, 80
    %v318 = vpop.permute.xlu0 %317
    %319 = vrot.lane.b32.xlu0 %v286, 80
    %v320 = vpop.permute.xlu0 %319
    %321 = vrot.lane.b32.xlu0 %v288, 80
    %v322 = vpop.permute.xlu0 %321
    %323 = vrot.lane.b32.xlu0 %v290, 80
    %v324 = vpop.permute.xlu0 %323
    %325 = vrot.lane.b32.xlu0 %v292, 80
    %v326 = vpop.permute.xlu0 %325
    %327 = vrot.lane.b32.xlu0 %v294, 80
    %v328 = vpop.permute.xlu0 %327
    %329 = vrot.lane.b32.xlu0 %v296, 80
    %v330 = vpop.permute.xlu0 %329
    %331 = vrot.lane.b32.xlu0 %v298, 80
    %v332 = vpop.permute.xlu0 %331
    %333 = vrot.lane.b32.xlu0 %v300, 80
    %v334 = vpop.permute.xlu0 %333
    %335 = vrot.lane.b32.xlu0 %v302, 80
    %v336 = vpop.permute.xlu0 %335
    %337 = vrot.lane.b32.xlu0 %v305, 80
    %v338 = vpop.permute.xlu0 %337
    %v355 = vadd.f32 %v161, %v308
    %v356 = vadd.f32 %v167, %v310
    %v357 = vadd.f32 %v173, %v312
    %v358 = vadd.f32 %v179, %v314
    %v359 = vadd.f32 %v185, %v316
    %v360 = vadd.f32 %v191, %v318
    %v361 = vadd.f32 %v197, %v320
    %v362 = vadd.f32 %v203, %v322
    %v363 = vadd.f32 %v209, %v324
    %v364 = vadd.f32 %v215, %v326
    %v365 = vadd.f32 %v221, %v328
    %v366 = vadd.f32 %v227, %v330
    %v367 = vadd.f32 %v233, %v332
    %v368 = vadd.f32 %v239, %v334
    %v369 = vadd.f32 %v245, %v336
    %v370 = vadd.f32 %v251, %v338
    %vm387 = vcmask 1045504
    %v388 = vrot.slane %v161, 2
    %v389 = vrot.slane %v167, 2
    %v390 = vsel %vm387, %v388, %v389
    %v391 = vrot.slane %v163, 2
    %v392 = vrot.slane %v169, 2
    %v393 = vsel %vm387, %v391, %v392
    %v394 = vrot.slane %v173, 2
    %v395 = vsel %vm387, %v389, %v394
    %v396 = vrot.slane %v175, 2
    %v397 = vsel %vm387, %v392, %v396
    %v398 = vrot.slane %v179, 2
    %v399 = vsel %vm387, %v394, %v398
    %v400 = vrot.slane %v181, 2
    %v401 = vsel %vm387, %v396, %v400
    %v402 = vrot.slane %v185, 2
    %v403 = vsel %vm387, %v398, %v402
    %v404 = vrot.slane %v187, 2
    %v405 = vsel %vm387, %v400, %v404
    %v406 = vrot.slane %v191, 2
    %v407 = vsel %vm387, %v402, %v406
    %v408 = vrot.slane %v193, 2
    %v409 = vsel %vm387, %v404, %v408
    %v410 = vrot.slane %v197, 2
    %v411 = vsel %vm387, %v406, %v410
    %v412 = vrot.slane %v199, 2
    %v413 = vsel %vm387, %v408, %v412
    %v414 = vrot.slane %v203, 2
    %v415 = vsel %vm387, %v410, %v414
    %v416 = vrot.slane %v205, 2
    %v417 = vsel %vm387, %v412, %v416
    %v418 = vrot.slane %v209, 2
    %v419 = vsel %vm387, %v414, %v418
    %v420 = vrot.slane %v211, 2
    %v421 = vsel %vm387, %v416, %v420
    %v422 = vrot.slane %v215, 2
    %v423 = vsel %vm387, %v418, %v422
    %v424 = vrot.slane %v217, 2
    %v425 = vsel %vm387, %v420, %v424
    %v426 = vrot.slane %v221, 2
    %v427 = vsel %vm387, %v422, %v426
    %v428 = vrot.slane %v223, 2
    %v429 = vsel %vm387, %v424, %v428
    %v430 = vrot.slane %v227, 2
    %v431 = vsel %vm387, %v426, %v430
    %v432 = vrot.slane %v229, 2
    %v433 = vsel %vm387, %v428, %v432
    %v434 = vrot.slane %v233, 2
    %v435 = vsel %vm387, %v430, %v434
    %v436 = vrot.slane %v235, 2
    %v437 = vsel %vm387, %v432, %v436
    %v438 = vrot.slane %v239, 2
    %v439 = vsel %vm387, %v434, %v438
    %v440 = vrot.slane %v241, 2
    %v441 = vsel %vm387, %v436, %v440
    %v442 = vrot.slane %v245, 2
    %v443 = vsel %vm387, %v438, %v442
    %v444 = vrot.slane %v247, 2
    %v445 = vsel %vm387, %v440, %v444
    %v446 = vrot.slane %v251, 2
    %v447 = vsel %vm387, %v442, %v446
    %v448 = vrot.slane %v253, 2
    %v449 = vsel %vm387, %v444, %v448
    %v454 = vsel %vm387, %v446, %v388
    %v455 = vsel %vm387, %v448, %v391
    %458 = vrot.lane.b32.xlu0 %v390, 32
    %v459 = vpop.permute.xlu0 %458
    %460 = vrot.lane.b32.xlu0 %v393, 32
    %v461 = vpop.permute.xlu0 %460
    %462 = vrot.lane.b32.xlu0 %v395, 32
    %v463 = vpop.permute.xlu0 %462
    %464 = vrot.lane.b32.xlu0 %v397, 32
    %v465 = vpop.permute.xlu0 %464
    %466 = vrot.lane.b32.xlu0 %v399, 32
    %v467 = vpop.permute.xlu0 %466
    %468 = vrot.lane.b32.xlu0 %v401, 32
    %v469 = vpop.permute.xlu0 %468
    %470 = vrot.lane.b32.xlu0 %v403, 32
    %v471 = vpop.permute.xlu0 %470
    %472 = vrot.lane.b32.xlu0 %v405, 32
    %v473 = vpop.permute.xlu0 %472
    %474 = vrot.lane.b32.xlu0 %v407, 32
    %v475 = vpop.permute.xlu0 %474
    %476 = vrot.lane.b32.xlu0 %v409, 32
    %v477 = vpop.permute.xlu0 %476
    %478 = vrot.lane.b32.xlu0 %v411, 32
    %v479 = vpop.permute.xlu0 %478
    %480 = vrot.lane.b32.xlu0 %v413, 32
    %v481 = vpop.permute.xlu0 %480
    %482 = vrot.lane.b32.xlu0 %v415, 32
    %v483 = vpop.permute.xlu0 %482
    %484 = vrot.lane.b32.xlu0 %v417, 32
    %v485 = vpop.permute.xlu0 %484
    %486 = vrot.lane.b32.xlu0 %v419, 32
    %v487 = vpop.permute.xlu0 %486
    %488 = vrot.lane.b32.xlu0 %v421, 32
    %v489 = vpop.permute.xlu0 %488
    %490 = vrot.lane.b32.xlu0 %v423, 32
    %v491 = vpop.permute.xlu0 %490
    %492 = vrot.lane.b32.xlu0 %v425, 32
    %v493 = vpop.permute.xlu0 %492
    %494 = vrot.lane.b32.xlu0 %v427, 32
    %v495 = vpop.permute.xlu0 %494
    %496 = vrot.lane.b32.xlu0 %v429, 32
    %v497 = vpop.permute.xlu0 %496
    %498 = vrot.lane.b32.xlu0 %v431, 32
    %v499 = vpop.permute.xlu0 %498
    %500 = vrot.lane.b32.xlu0 %v433, 32
    %v501 = vpop.permute.xlu0 %500
    %502 = vrot.lane.b32.xlu0 %v435, 32
    %v503 = vpop.permute.xlu0 %502
    %504 = vrot.lane.b32.xlu0 %v437, 32
    %v505 = vpop.permute.xlu0 %504
    %506 = vrot.lane.b32.xlu0 %v439, 32
    %v507 = vpop.permute.xlu0 %506
    %508 = vrot.lane.b32.xlu0 %v441, 32
    %v509 = vpop.permute.xlu0 %508
    %510 = vrot.lane.b32.xlu0 %v443, 32
    %v511 = vpop.permute.xlu0 %510
    %512 = vrot.lane.b32.xlu0 %v445, 32
    %v513 = vpop.permute.xlu0 %512
    %514 = vrot.lane.b32.xlu0 %v447, 32
    %v515 = vpop.permute.xlu0 %514
    %516 = vrot.lane.b32.xlu0 %v449, 32
    %v517 = vpop.permute.xlu0 %516
    %518 = vrot.lane.b32.xlu0 %v454, 32
    %v519 = vpop.permute.xlu0 %518
    %520 = vrot.lane.b32.xlu0 %v455, 32
    %v521 = vpop.permute.xlu0 %520
    %v522 = vsel %vm45, %v459, %v461
    %v523 = vsel %vm45, %v463, %v465
    %v524 = vsel %vm45, %v467, %v469
    %v525 = vsel %vm45, %v471, %v473
    %v526 = vsel %vm45, %v475, %v477
    %v527 = vsel %vm45, %v479, %v481
    %v528 = vsel %vm45, %v483, %v485
    %v529 = vsel %vm45, %v487, %v489
    %v530 = vsel %vm45, %v491, %v493
    %v531 = vsel %vm45, %v495, %v497
    %v532 = vsel %vm45, %v499, %v501
    %v533 = vsel %vm45, %v503, %v505
    %v534 = vsel %vm45, %v507, %v509
    %v535 = vsel %vm45, %v511, %v513
    %v536 = vsel %vm45, %v515, %v517
    %v537 = vsel %vm45, %v519, %v521
    %v554 = vadd.f32 %v355, %v522
    %v555 = vadd.f32 %v356, %v523
    %v556 = vadd.f32 %v357, %v524
    %v557 = vadd.f32 %v358, %v525
    %v558 = vadd.f32 %v359, %v526
    %v559 = vadd.f32 %v360, %v527
    %v560 = vadd.f32 %v361, %v528
    %v561 = vadd.f32 %v362, %v529
    %v562 = vadd.f32 %v363, %v530
    %v563 = vadd.f32 %v364, %v531
    %v564 = vadd.f32 %v365, %v532
    %v565 = vadd.f32 %v366, %v533
    %v566 = vadd.f32 %v367, %v534
    %v567 = vadd.f32 %v368, %v535
    %v568 = vadd.f32 %v369, %v536
    %v569 = vadd.f32 %v370, %v537
    %vm570 = vcmask 1044480
    %v571 = vrot.slane %v163, 3
    %v572 = vrot.slane %v169, 3
    %v573 = vsel %vm570, %v571, %v572
    %v574 = vrot.slane %v175, 3
    %v575 = vsel %vm570, %v572, %v574
    %v576 = vrot.slane %v181, 3
    %v577 = vsel %vm570, %v574, %v576
    %v578 = vrot.slane %v187, 3
    %v579 = vsel %vm570, %v576, %v578
    %v580 = vrot.slane %v193, 3
    %v581 = vsel %vm570, %v578, %v580
    %v582 = vrot.slane %v199, 3
    %v583 = vsel %vm570, %v580, %v582
    %v584 = vrot.slane %v205, 3
    %v585 = vsel %vm570, %v582, %v584
    %v586 = vrot.slane %v211, 3
    %v587 = vsel %vm570, %v584, %v586
    %v588 = vrot.slane %v217, 3
    %v589 = vsel %vm570, %v586, %v588
    %v590 = vrot.slane %v223, 3
    %v591 = vsel %vm570, %v588, %v590
    %v592 = vrot.slane %v229, 3
    %v593 = vsel %vm570, %v590, %v592
    %v594 = vrot.slane %v235, 3
    %v595 = vsel %vm570, %v592, %v594
    %v596 = vrot.slane %v241, 3
    %v597 = vsel %vm570, %v594, %v596
    %v598 = vrot.slane %v247, 3
    %v599 = vsel %vm570, %v596, %v598
    %v600 = vrot.slane %v253, 3
    %v601 = vsel %vm570, %v598, %v600
    %v604 = vsel %vm570, %v600, %v571
    %606 = vrot.lane.b32.xlu0 %v573, 112
    %v607 = vpop.permute.xlu0 %606
    %608 = vrot.lane.b32.xlu0 %v575, 112
    %v609 = vpop.permute.xlu0 %608
    %610 = vrot.lane.b32.xlu0 %v577, 112
    %v611 = vpop.permute.xlu0 %610
    %612 = vrot.lane.b32.xlu0 %v579, 112
    %v613 = vpop.permute.xlu0 %612
    %614 = vrot.lane.b32.xlu0 %v581, 112
    %v615 = vpop.permute.xlu0 %614
    %616 = vrot.lane.b32.xlu0 %v583, 112
    %v617 = vpop.permute.xlu0 %616
    %618 = vrot.lane.b32.xlu0 %v585, 112
    %v619 = vpop.permute.xlu0 %618
    %620 = vrot.lane.b32.xlu0 %v587, 112
    %v621 = vpop.permute.xlu0 %620
    %622 = vrot.lane.b32.xlu0 %v589, 112
    %v623 = vpop.permute.xlu0 %622
    %624 = vrot.lane.b32.xlu0 %v591, 112
    %v625 = vpop.permute.xlu0 %624
    %626 = vrot.lane.b32.xlu0 %v593, 112
    %v627 = vpop.permute.xlu0 %626
    %628 = vrot.lane.b32.xlu0 %v595, 112
    %v629 = vpop.permute.xlu0 %628
    %630 = vrot.lane.b32.xlu0 %v597, 112
    %v631 = vpop.permute.xlu0 %630
    %632 = vrot.lane.b32.xlu0 %v599, 112
    %v633 = vpop.permute.xlu0 %632
    %634 = vrot.lane.b32.xlu0 %v601, 112
    %v635 = vpop.permute.xlu0 %634
    %636 = vrot.lane.b32.xlu0 %v604, 112
    %v637 = vpop.permute.xlu0 %636
    %v654 = vadd.f32 %v554, %v607
    %v655 = vadd.f32 %v555, %v609
    %v656 = vadd.f32 %v556, %v611
    %v657 = vadd.f32 %v557, %v613
    %v658 = vadd.f32 %v558, %v615
    %v659 = vadd.f32 %v559, %v617
    %v660 = vadd.f32 %v560, %v619
    %v661 = vadd.f32 %v561, %v621
    %v662 = vadd.f32 %v562, %v623
    %v663 = vadd.f32 %v563, %v625
    %v664 = vadd.f32 %v564, %v627
    %v665 = vadd.f32 %v565, %v629
    %v666 = vadd.f32 %v566, %v631
    %v667 = vadd.f32 %v567, %v633
    %v668 = vadd.f32 %v568, %v635
    %v669 = vadd.f32 %v569, %v637
    %vm670 = vcmask 1043456
    %v671 = vrot.slane %v163, 4
    %v672 = vrot.slane %v169, 4
    %v673 = vsel %vm670, %v671, %v672
    %v674 = vrot.slane %v175, 4
    %v675 = vsel %vm670, %v672, %v674
    %v676 = vrot.slane %v181, 4
    %v677 = vsel %vm670, %v674, %v676
    %v678 = vrot.slane %v187, 4
    %v679 = vsel %vm670, %v676, %v678
    %v680 = vrot.slane %v193, 4
    %v681 = vsel %vm670, %v678, %v680
    %v682 = vrot.slane %v199, 4
    %v683 = vsel %vm670, %v680, %v682
    %v684 = vrot.slane %v205, 4
    %v685 = vsel %vm670, %v682, %v684
    %v686 = vrot.slane %v211, 4
    %v687 = vsel %vm670, %v684, %v686
    %v688 = vrot.slane %v217, 4
    %v689 = vsel %vm670, %v686, %v688
    %v690 = vrot.slane %v223, 4
    %v691 = vsel %vm670, %v688, %v690
    %v692 = vrot.slane %v229, 4
    %v693 = vsel %vm670, %v690, %v692
    %v694 = vrot.slane %v235, 4
    %v695 = vsel %vm670, %v692, %v694
    %v696 = vrot.slane %v241, 4
    %v697 = vsel %vm670, %v694, %v696
    %v698 = vrot.slane %v247, 4
    %v699 = vsel %vm670, %v696, %v698
    %v700 = vrot.slane %v253, 4
    %v701 = vsel %vm670, %v698, %v700
    %v704 = vsel %vm670, %v700, %v671
    %706 = vrot.lane.b32.xlu0 %v673, 64
    %v707 = vpop.permute.xlu0 %706
    %708 = vrot.lane.b32.xlu0 %v675, 64
    %v709 = vpop.permute.xlu0 %708
    %710 = vrot.lane.b32.xlu0 %v677, 64
    %v711 = vpop.permute.xlu0 %710
    %712 = vrot.lane.b32.xlu0 %v679, 64
    %v713 = vpop.permute.xlu0 %712
    %714 = vrot.lane.b32.xlu0 %v681, 64
    %v715 = vpop.permute.xlu0 %714
    %716 = vrot.lane.b32.xlu0 %v683, 64
    %v717 = vpop.permute.xlu0 %716
    %718 = vrot.lane.b32.xlu0 %v685, 64
    %v719 = vpop.permute.xlu0 %718
    %720 = vrot.lane.b32.xlu0 %v687, 64
    %v721 = vpop.permute.xlu0 %720
    %722 = vrot.lane.b32.xlu0 %v689, 64
    %v723 = vpop.permute.xlu0 %722
    %724 = vrot.lane.b32.xlu0 %v691, 64
    %v725 = vpop.permute.xlu0 %724
    %726 = vrot.lane.b32.xlu0 %v693, 64
    %v727 = vpop.permute.xlu0 %726
    %728 = vrot.lane.b32.xlu0 %v695, 64
    %v729 = vpop.permute.xlu0 %728
    %730 = vrot.lane.b32.xlu0 %v697, 64
    %v731 = vpop.permute.xlu0 %730
    %732 = vrot.lane.b32.xlu0 %v699, 64
    %v733 = vpop.permute.xlu0 %732
    %734 = vrot.lane.b32.xlu0 %v701, 64
    %v735 = vpop.permute.xlu0 %734
    %736 = vrot.lane.b32.xlu0 %v704, 64
    %v737 = vpop.permute.xlu0 %736
    %v754 = vadd.f32 %v654, %v707
    %v755 = vadd.f32 %v655, %v709
    %v756 = vadd.f32 %v656, %v711
    %v757 = vadd.f32 %v657, %v713
    %v758 = vadd.f32 %v658, %v715
    %v759 = vadd.f32 %v659, %v717
    %v760 = vadd.f32 %v660, %v719
    %v761 = vadd.f32 %v661, %v721
    %v762 = vadd.f32 %v662, %v723
    %v763 = vadd.f32 %v663, %v725
    %v764 = vadd.f32 %v664, %v727
    %v765 = vadd.f32 %v665, %v729
    %v766 = vadd.f32 %v666, %v731
    %v767 = vadd.f32 %v667, %v733
    %v768 = vadd.f32 %v668, %v735
    %v769 = vadd.f32 %v669, %v737
    %v770 = vlaneseq
    %v771 = vshrl.u32 %v770, 7
    %v772 = vadd.s32 %v771, 8
    %v773 = vlaneseq
    %v774 = vand.u32 %v773, 127
    %vm775 = vcmp.lt.s32.totalorder %v774, 32
    %v776 = vsel %vm775, 13, 12
    %vm777 = vcmp.lt.s32.totalorder %v774, 16
    %v778 = vsel %vm777, 14, %v776
    %vm779 = vcmp.lt.s32.totalorder %v771, %v778
    %vm780 = vcmp.lt.s32.totalorder %v772, %v778
    %v781 = vsel %vm779, %v754, -inf
    %v782 = vsel %vm780, %v755, -inf
    %v783 = vsel %vm779, %v756, -inf
    %v784 = vsel %vm780, %v757, -inf
    %v785 = vsel %vm779, %v758, -inf
    %v786 = vsel %vm780, %v759, -inf
    %v787 = vsel %vm779, %v760, -inf
    %v788 = vsel %vm780, %v761, -inf
    %v789 = vsel %vm779, %v762, -inf
    %v790 = vsel %vm780, %v763, -inf
    %v791 = vsel %vm779, %v764, -inf
    %v792 = vsel %vm780, %v765, -inf
    %v793 = vsel %vm779, %v766, -inf
    %v794 = vsel %vm780, %v767, -inf
    %v795 = vsel %vm779, %v768, -inf
    %v796 = vsel %vm780, %v769, -inf
    %vm797 = vcmask 392192
    %v798 = vsel %vm797, %v781, -inf
    %v799 = vsel %vm797, %v782, -inf
    %v800 = vmax.f32 %v798, %v799
    %v801 = vrot.slane %v800, 4
    %v802 = vmax.f32 %v800, %v801
    %v803 = vrot.slane %v802, 2
    %v804 = vmax.f32 %v802, %v803
    %v805 = vrot.slane %v804, 1
    %v806 = vmax.f32 %v804, %v805
    %v807 = vsel %vm797, %v783, -inf
    %v808 = vsel %vm797, %v784, -inf
    %v809 = vmax.f32 %v807, %v808
    %v810 = vrot.slane %v809, 4
    %v811 = vmax.f32 %v809, %v810
    %v812 = vrot.slane %v811, 2
    %v813 = vmax.f32 %v811, %v812
    %v814 = vrot.slane %v813, 1
    %v815 = vmax.f32 %v813, %v814
    %v816 = vsel %vm797, %v785, -inf
    %v817 = vsel %vm797, %v786, -inf
    %v818 = vmax.f32 %v816, %v817
    %v819 = vrot.slane %v818, 4
    %v820 = vmax.f32 %v818, %v819
    %v821 = vrot.slane %v820, 2
    %v822 = vmax.f32 %v820, %v821
    %v823 = vrot.slane %v822, 1
    %v824 = vmax.f32 %v822, %v823
    %v825 = vsel %vm797, %v787, -inf
    %v826 = vsel %vm797, %v788, -inf
    %v827 = vmax.f32 %v825, %v826
    %v828 = vrot.slane %v827, 4
    %v829 = vmax.f32 %v827, %v828
    %v830 = vrot.slane %v829, 2
    %v831 = vmax.f32 %v829, %v830
    %v832 = vrot.slane %v831, 1
    %v833 = vmax.f32 %v831, %v832
    %v834 = vsel %vm797, %v789, -inf
    %v835 = vsel %vm797, %v790, -inf
    %v836 = vmax.f32 %v834, %v835
    %v837 = vrot.slane %v836, 4
    %v838 = vmax.f32 %v836, %v837
    %v839 = vrot.slane %v838, 2
    %v840 = vmax.f32 %v838, %v839
    %v841 = vrot.slane %v840, 1
    %v842 = vmax.f32 %v840, %v841
    %v843 = vsel %vm797, %v791, -inf
    %v844 = vsel %vm797, %v792, -inf
    %v845 = vmax.f32 %v843, %v844
    %v846 = vrot.slane %v845, 4
    %v847 = vmax.f32 %v845, %v846
    %v848 = vrot.slane %v847, 2
    %v849 = vmax.f32 %v847, %v848
    %v850 = vrot.slane %v849, 1
    %v851 = vmax.f32 %v849, %v850
    %v852 = vsel %vm797, %v793, -inf
    %v853 = vsel %vm797, %v794, -inf
    %v854 = vmax.f32 %v852, %v853
    %v855 = vrot.slane %v854, 4
    %v856 = vmax.f32 %v854, %v855
    %v857 = vrot.slane %v856, 2
    %v858 = vmax.f32 %v856, %v857
    %v859 = vrot.slane %v858, 1
    %v860 = vmax.f32 %v858, %v859
    %v861 = vsel %vm797, %v795, -inf
    %v862 = vsel %vm797, %v796, -inf
    %v863 = vmax.f32 %v861, %v862
    %v864 = vrot.slane %v863, 4
    %v865 = vmax.f32 %v863, %v864
    %v866 = vrot.slane %v865, 2
    %v867 = vmax.f32 %v865, %v866
    %v868 = vrot.slane %v867, 1
    %v869 = vmax.f32 %v867, %v868
    %v870 = vld [vmem:[%s2] sm:$0x1]
    %v872 = vlaneseq
    %v873 = vshrl.u32 %v872, 7
    %v874 = vsub.s32 0, %v873
    %v875 = vrot.slane %v870, %v874
    %v877 = vadd.f32 %v806, %v875
    %v878 = vadd.f32 %v815, %v875
    %v879 = vadd.f32 %v824, %v875
    %v880 = vadd.f32 %v833, %v875
    %v881 = vadd.f32 %v842, %v875
    %v882 = vadd.f32 %v851, %v875
    %v883 = vadd.f32 %v860, %v875
    %v884 = vadd.f32 %v869, %v875
    %v885 = vmax.f32 %v877, 0.0
    %v886 = vmax.f32 %v878, 0.0
    %v887 = vmax.f32 %v879, 0.0
    %v888 = vmax.f32 %v880, 0.0
    %v889 = vmax.f32 %v881, 0.0
    %v890 = vmax.f32 %v882, 0.0
    %v891 = vmax.f32 %v883, 0.0
    %v892 = vmax.f32 %v884, 0.0
    %v893 = vld [vmem:[%s3] sm:$0xff]
    %v894 = vld [vmem:[%s3 + $0x8] sm:$0xff]
    %v895 = vld [vmem:[%s3 + $0x10] sm:$0xff]
    %v896 = vld [vmem:[%s3 + $0x18] sm:$0xff]
    %v897 = vld [vmem:[%s3 + $0x20] sm:$0xff]
    %v898 = vld [vmem:[%s3 + $0x28] sm:$0xff]
    %v899 = vld [vmem:[%s4] sm:$0x1]
    %v901 = vlaneseq
    %v902 = vshrl.u32 %v901, 7
    %v903 = vsub.s32 0, %v902
    %v904 = vrot.slane %v899, %v903
    %v914 = vrot.slane %v886, 7
    %vm915 = vcmask 1041409
    %v916 = vsel %vm915, %v914, %v885
    %v917 = vrot.slane %v887, 6
    %vm918 = vcmask 1042434
    %v919 = vsel %vm918, %v917, %v916
    %v920 = vrot.slane %v888, 5
    %vm921 = vcmask 1043459
    %v922 = vsel %vm921, %v920, %v919
    %v923 = vrot.slane %v889, 4
    %vm924 = vcmask 1044484
    %v925 = vsel %vm924, %v923, %v922
    %v926 = vrot.slane %v890, 3
    %vm927 = vcmask 1045509
    %v928 = vsel %vm927, %v926, %v925
    %v929 = vrot.slane %v891, 2
    %vm930 = vcmask 1046534
    %v931 = vsel %vm930, %v929, %v928
    %v932 = vrot.slane %v892, 1
    %vm933 = vcmask 1047559
    %v934 = vsel %vm933, %v932, %v931
    %v935 = vsel %vm797, %v934, 0
    %937 = vmatprep.subr.mxu0 0.0
    %938 = vmatpush1.msra.mxu0 %v893
    %939 = vmatprep.subr.mxu0 0.0
    %940 = vmatpush1.msra.mxu0 %v894
    %941 = vmatprep.subr.mxu0 0.0
    %942 = vmatpush1.msra.mxu0 %v895
    %943 = vmatprep.subr.mxu0 0.0
    %944 = vmatpush1.msra.mxu0 %v896
    %945 = vmatprep.subr.mxu0 0.0
    %946 = vmatpush1.msra.mxu0 %v897
    %947 = vmatprep.subr.mxu0 0.0
    %948 = vmatpush1.msra.mxu0 %v898
    %949 = vmatprep.subr.mxu0 0.0
    %950 = vmatpush1.msra.mxu0 0.0
    %951 = vmatprep.subr.mxu0 0.0
    %952 = vmatpush1.msra.mxu0 0.0
    %953 = vmatprep.subr.mxu0 0.0
    %954 = vmatpush1.msra.mxu0 0.0
    %955 = vmatprep.subr.mxu0 0.0
    %956 = vmatpush1.msra.mxu0 0.0
    %957 = vmatprep.subr.mxu0 0.0
    %958 = vmatpush1.msra.mxu0 0.0
    %959 = vmatprep.subr.mxu0 0.0
    %960 = vmatpush1.msra.mxu0 0.0
    %961 = vmatprep.subr.mxu0 0.0
    %962 = vmatpush1.msra.mxu0 0.0
    %963 = vmatprep.subr.mxu0 0.0
    %964 = vmatpush1.msra.mxu0 0.0
    %965 = vmatprep.subr.mxu0 0.0
    %966 = vmatpush1.msra.mxu0 0.0
    %967 = vmatprep.subr.mxu0 0.0
    %968 = vmatpush1.msra.mxu0 0.0
    %969 = vmatprep.subr.mxu0 0.0
    %970 = vmatpush1.msra.mxu0 0.0
    %971 = vmatprep.subr.mxu0 0.0
    %972 = vmatpush1.msra.mxu0 0.0
    %973 = vmatprep.subr.mxu0 0.0
    %974 = vmatpush1.msra.mxu0 0.0
    %975 = vmatprep.subr.mxu0 0.0
    %976 = vmatpush1.msra.mxu0 0.0
    %977 = vmatprep.subr.mxu0 0.0
    %978 = vmatpush1.msra.mxu0 0.0
    %979 = vmatprep.subr.mxu0 0.0
    %980 = vmatpush1.msra.mxu0 0.0
    %981 = vmatprep.subr.mxu0 0.0
    %982 = vmatpush1.msra.mxu0 0.0
    %983 = vmatprep.subr.mxu0 0.0
    %984 = vmatpush1.msra.mxu0 0.0
    %985 = vmatprep.subr.mxu0 0.0
    %986 = vmatpush1.msra.mxu0 0.0
    %987 = vmatprep.subr.mxu0 0.0
    %988 = vmatpush1.msra.mxu0 0.0
    %989 = vmatprep.subr.mxu0 0.0
    %990 = vmatpush1.msra.mxu0 0.0
    %991 = vmatprep.subr.mxu0 0.0
    %992 = vmatpush1.msra.mxu0 0.0
    %993 = vmatprep.subr.mxu0 0.0
    %994 = vmatpush1.msra.mxu0 0.0
    %995 = vmatprep.subr.mxu0 0.0
    %996 = vmatpush1.msra.mxu0 0.0
    %997 = vmatprep.subr.mxu0 0.0
    %998 = vmatpush1.msra.mxu0 0.0
    %999 = vmatprep.subr.mxu0 0.0
    %1000 = vmatpush1.msra.mxu0 0.0
    %1001 = vmatprep.mubr.f32.mxu0 0.0
    %1002 = vmatmul.mubr.f32.gmra.mrb[0].mxu0 %v935
    %v1003 = vpop.f32.mrb[0].mxu0
    %v1004 = vadd.f32 %v904, %v1003
    %v1005 = vpop.f32.mrb[0].mxu0
    %1006 = vdwg.mxu0
    %vm1007 = vcmask 64512
    %1008 = vst.msk [vmem:[#allocation2] sm:$0xff] %vm1007, %v1004
    // Predicated region
    $region22: #{tpu_custom_call.1} parent=1 // pred_check
      _
    $region23: #{tpu_custom_call.1} parent=1 // pred_check_branch
      %1010 = sbr.rel (0) target = $region25
    $region24: #{tpu_custom_call.1} parent=1 // pred_region
      %s1012 = ssub.s32 128, 128
      %1013 = vsyncadd [#allocation3], %s1012
      %s1015 = sshll.u32 [#allocation2], 4
      %s1016 = int_to_ptr.vmem [resolvable:$true] %s1015
      %1018 = dma.vmem_to_hbm [thread:$0]  %s1016, 128, %s5, [#allocation3]
    $region25: #{tpu_custom_call.1} parent=1 // pred_fallthru
      _
    // Predicated region
    $region26: #{tpu_custom_call.1} parent=1 // pred_check
      _
    $region27: #{tpu_custom_call.1} parent=1 // pred_check_branch
      %1020 = sbr.rel (0) target = $region29
    $region28: #{tpu_custom_call.1} parent=1 // pred_region
      %1021 = dma.done [#allocation3], 128
    $region29: #{tpu_custom_call.1} parent=1 // pred_fallthru
      _
    %1022 = vsyncpa [#allocation3], 1

</llo_original>
